<compile_context>
chip_gen: v6e
topology: v6e:2x2x1
jax: 0.10.0
libtpu: 0.0.40
codegen_flags: <defaults>
</compile_context>

<pallas_src>
import jax
import jax.numpy as jnp
from jax.experimental import pallas as pl
from jax.experimental.pallas import tpu as pltpu


_LANE = 128


def _round_up(x, m):
    return ((x + m - 1) // m) * m


def _sublane(dtype):
    # Second-minor layout tile: 8 for 4-byte, 16 for 2-byte, 32 for 1-byte dtypes.
    return {4: 8, 2: 16, 1: 32}.get(jnp.dtype(dtype).itemsize, 8)


def _vmem_budget_and_limit():
    """Generation-aware working-set budget (~65%) and scoped limit (~85%)."""
    try:
        cap = int(pltpu.get_tpu_info().vmem_capacity_bytes)
    except Exception:
        cap = 64 * 1024 * 1024          # conservative fallback (v7x-sized VMEM)
    return (65 * cap) // 100, (85 * cap) // 100


def _choose_batch_tile(B, per_row_bytes, fixed_bytes, budget_bytes, tb_align):
    """Largest batch tile whose padded, double-buffered footprint fits the
    budget, with >=2 grid steps when B allows it (v7x megacore) and near-equal
    tiles (no tiny ragged last tile)."""
    avail = max(budget_bytes - fixed_bytes, per_row_bytes)
    tb = max(int(avail // per_row_bytes), 1)
    tb = min(tb, B)
    # Keep both v7x TensorCores busy when the whole batch would otherwise fit.
    if tb >= B and B >= 2 * tb_align:
        tb = pl.cdiv(B, 2)
    if tb >= B:
        return B
    # Near-equal, sublane-aligned tiles (tb is the 2nd-minor dim of 2-D blocks).
    nsteps = pl.cdiv(B, tb)
    return min(_round_up(pl.cdiv(B, nsteps), tb_align), B)


def _probes_native_kernel(x_ref, w_ref, o_ref):
    # x_ref: (TB, P, D) lane-aligned activations; w_ref: (P, D) resident weights;
    # o_ref: (TB, P) lane-oriented output tile.  VPU multiply + XLU reduce + EUP
    # sigmoid; f32 accumulate even for bf16 inputs (safe on v5e: no bf16 VPU).
    x = x_ref[...].astype(jnp.float32)
    w = w_ref[...].astype(jnp.float32)
    s = jnp.sum(x * w[None, :, :], axis=-1)            # (TB, P)
    o_ref[...] = jax.nn.sigmoid(s).astype(o_ref.dtype)


def _probes_flat_kernel(x_ref, w_ref, o_ref):
    # x_ref: (TB, F)  lane-dense flattened activations, F = P*D
    # w_ref: (F, P)   block-diagonal probe weights: w_ref[p*D + d, p] = W[p, d]
    # o_ref: (TB, P)
    # One MXU matmul folds the weight multiply and the per-probe segment
    # reduction; accumulation is f32 via preferred_element_type.  (At default
    # MXU precision f32 operands are rounded to bf16 -> ~1e-3 output error.)
    s = jnp.dot(x_ref[...], w_ref[...], preferred_element_type=jnp.float32)
    o_ref[...] = jax.nn.sigmoid(s).astype(o_ref.dtype)


def linear_probes_forward(x, w):
    """x: (B, P, D), w: (P, D) -> (B, P, 1); output dtype follows x."""
    assert x.ndim == 3
    B, P, D = x.shape
    assert w.shape == (P, D)

    itemsize = jnp.dtype(x.dtype).itemsize
    w_itemsize = jnp.dtype(w.dtype).itemsize
    sub = _sublane(x.dtype)
    w_sub = _sublane(w.dtype)
    budget, vmem_limit = _vmem_budget_and_limit()

    F = P * D
    lane_aligned = (D % _LANE == 0) and (P % sub == 0)
    # Padded block-diagonal weight footprint (x-dtype, 2 pipeline buffers).
    wmat_bytes = 2 * _round_up(F, sub) * _round_up(P, _LANE) * itemsize
    use_flat = (not lane_aligned) and (wmat_bytes <= budget // 4)

    out_row = 2 * _round_up(P, _LANE) * itemsize        # (tb, P) out block, 2 buffers

    if use_flat:
        # --- Lane-dense path: avoids (8,128) padding waste for small P / D. ---
        x_op = x.reshape(B, F)                          # free if producer keeps (B, F)
        w_mat = (w.reshape(F, 1).astype(x.dtype)
                 * jnp.repeat(jnp.eye(P, dtype=x.dtype), D, axis=0))     # (F, P)
        per_row = 2 * _round_up(F, _LANE) * itemsize + out_row
        fixed = wmat_bytes
        tb = _choose_batch_tile(B, per_row, fixed, budget, sub)
        kernel = _probes_flat_kernel
        in_specs = [
            pl.BlockSpec((tb, F), lambda i: (i, 0)),
            # Constant index_map -> weights stay resident (no re-DMA); they are
            # still double-buffered by the pipeline and accounted for above.
            # TODO(synk): single-buffer the invariant weight block via
            # pipeline_mode=pl.Buffered(1) once confirmed supported here.
            pl.BlockSpec((F, P), lambda i: (0, 0)),
        ]
        flops = 2 * B * F * P                           # block-diag matmul (redundant MACs)
        bytes_accessed = B * F * itemsize + F * P * itemsize + B * P * itemsize
        operands = (x_op, w_mat)
    else:
        # --- Native lane-aligned path: VPU multiply + XLU reduce (exact f32). ---
        # TODO(synk): for very large (P, D) weights (>~8-16 MiB padded on v7x's
        # 64 MiB VMEM), add a D-reduction grid axis (tiled weights + f32 VMEM
        # accumulator + pl.when finalize) so the batch tile can stay >= ~512 rows.
        w_fixed = _round_up(P, w_sub) * _round_up(D, _LANE) * w_itemsize
        per_row = 2 * _round_up(P, sub) * _round_up(D, _LANE) * itemsize + out_row
        fixed = 2 * w_fixed                             # weight block is double-buffered
        tb = _choose_batch_tile(B, per_row, fixed, budget, sub)
        kernel = _probes_native_kernel
        in_specs = [
            pl.BlockSpec((tb, P, D), lambda i: (i, 0, 0)),
            pl.BlockSpec((P, D), lambda i: (0, 0)),
        ]
        flops = 2 * B * P * D
        bytes_accessed = B * P * D * itemsize + P * D * w_itemsize + B * P * itemsize
        operands = (x, w)

    grid = (pl.cdiv(B, tb),)

    out_bp = pl.pallas_call(
        kernel,
        out_shape=jax.ShapeDtypeStruct((B, P), x.dtype),
        grid_spec=pltpu.PrefetchScalarGridSpec(
            num_scalar_prefetch=0,
            grid=grid,
            in_specs=in_specs,
            out_specs=pl.BlockSpec((tb, P), lambda i: (i, 0)),
        ),
        compiler_params=pltpu.CompilerParams(
            dimension_semantics=("parallel",),          # batch tiles shard across v7x TCs
            vmem_limit_bytes=vmem_limit,
        ),
        cost_estimate=pl.CostEstimate(
            flops=flops, transcendentals=B * P, bytes_accessed=bytes_accessed),
    )(*operands)

    return out_bp[..., None]                            # (B, P, 1) -- cheap reshape


def _reference(x, w):
    # Pure-JAX reference mirroring the PyTorch forward (exact f32, no MXU).
    xf = x.astype(jnp.float32)
    wf = w.astype(jnp.float32)
    return jax.nn.sigmoid(jnp.sum(xf * wf[None, :, :], axis=-1))[..., None]


if __name__ == "__main__":
    key = jax.random.PRNGKey(0)
    kx, kw, kx2, kw2 = jax.random.split(key, 4)

    # --- Config 1: module-spec small shapes (batch=2, num_probes=4, input_dim=32).
    # P/D not (8,128)-aligned -> lane-dense flattened path (MXU segment matmul).
    B, P, D = 2, 4, 32
    x = jax.random.normal(kx, (B, P, D), dtype=jnp.float32)
    bound = 1.0 / (D ** 0.5)            # nn.Linear(D, 1, bias=False) default init
    w = jax.random.uniform(kw, (P, D), dtype=jnp.float32, minval=-bound, maxval=bound)

    out = jax.block_until_ready(linear_probes_forward(x, w))
    ref = _reference(x, w)
    assert out.shape == (B, P, 1)
    # Default-precision MXU rounds f32 operands to bf16 -> ~1e-3 on sigmoid outputs.
    assert jnp.allclose(out.astype(jnp.float32), ref, atol=1e-2), "flat f32 path mismatch"

    # --- Config 2: same shapes, bf16 inputs (halves HBM traffic; f32 accumulate).
    out_bf16 = jax.block_until_ready(
        linear_probes_forward(x.astype(jnp.bfloat16), w.astype(jnp.bfloat16)))
    assert out_bf16.dtype == jnp.bfloat16
    assert jnp.allclose(out_bf16.astype(jnp.float32), ref, atol=3e-2), "bf16 path mismatch"

    # --- Config 3: lane-aligned shapes -> native (B, P, D) path (exact f32, 2 grid steps).
    B2, P2, D2 = 16, 8, 128
    x2 = jax.random.normal(kx2, (B2, P2, D2), dtype=jnp.float32)
    b2 = 1.0 / (D2 ** 0.5)
    w2 = jax.random.uniform(kw2, (P2, D2), dtype=jnp.float32, minval=-b2, maxval=b2)
    out2 = jax.block_until_ready(linear_probes_forward(x2, w2))
    assert jnp.allclose(out2, _reference(x2, w2), atol=1e-5, rtol=1e-5), "native path mismatch"

    print("KERNEL_OK")
</pallas_src>

<mosaic_0001>
module attributes {stable_mosaic.version = 11 : i64} {
  func.func @_probes_flat_kernel(%arg0: i32, %arg1: memref<2x128xf32, #tpu.memory_space<vmem>>, %arg2: memref<128x4xf32, #tpu.memory_space<vmem>>, %arg3: memref<2x4xf32, #tpu.memory_space<vmem>>) attributes {dimension_semantics = [#tpu.dimension_semantics<parallel>], iteration_bounds = array<i64: 1>, scalar_prefetch = 0 : i64, scratch_operands = 0 : i64, tpu.core_type = #tpu.core_type<tc>, window_params = [{transform_indices = @transform_0, window_bounds = array<i64: 2, 128>}, {pipeline_mode = #tpu.pipeline_mode<synchronous>, transform_indices = @transform_1, window_bounds = array<i64: 128, 4>}, {transform_indices = @transform_2, window_bounds = array<i64: 2, 4>}]} {
    %c0 = arith.constant 0 : index
    %c0_0 = arith.constant 0 : index
    %0 = vector.load %arg1[%c0, %c0_0] : memref<2x128xf32, #tpu.memory_space<vmem>>, vector<2x128xf32>
    %c0_1 = arith.constant 0 : index
    %c0_2 = arith.constant 0 : index
    %1 = vector.load %arg2[%c0_1, %c0_2] : memref<128x4xf32, #tpu.memory_space<vmem>>, vector<128x4xf32>
    %cst = arith.constant dense<0.000000e+00> : vector<2x4xf32>
    %2 = tpu.matmul %0, %1, %cst {dimension_numbers = #tpu.dot_dimension_numbers<[1], [0], [0], [1], [0, 0, 1, 1], [], []>} : vector<2x128xf32>, vector<128x4xf32>, vector<2x4xf32> -> vector<2x4xf32>
    %3 = arith.negf %2 : vector<2x4xf32>
    %4 = math.exp %3 : vector<2x4xf32>
    %cst_3 = arith.constant 1.000000e+00 : f32
    %5 = vector.broadcast %cst_3 : f32 to vector<2x4xf32>
    %6 = arith.addf %5, %4 : vector<2x4xf32>
    %7 = arith.divf %5, %6 : vector<2x4xf32>
    %c0_4 = arith.constant 0 : index
    %c0_5 = arith.constant 0 : index
    %8 = vector.load %arg3[%c0_4, %c0_5] : memref<2x4xf32, #tpu.memory_space<vmem>>, vector<2x4xf32>
    tpu.vector_store %arg3[%c0_4, %c0_5], %7 {strides = array<i32>} : memref<2x4xf32, #tpu.memory_space<vmem>>, vector<2x4xf32>,
    return
  }
  func.func @transform_0(%arg0: i32) -> (i32, i32) {
    %c0_i32 = arith.constant 0 : i32
    %c0_i32_0 = arith.constant 0 : i32
    return %arg0, %c0_i32 : i32, i32
  }
  func.func @transform_1(%arg0: i32) -> (i32, i32) {
    %c0_i32 = arith.constant 0 : i32
    %c0_i32_0 = arith.constant 0 : i32
    %c0_i32_1 = arith.constant 0 : i32
    return %c0_i32, %c0_i32_0 : i32, i32
  }
  func.func @transform_2(%arg0: i32) -> (i32, i32) {
    %c0_i32 = arith.constant 0 : i32
    %c0_i32_0 = arith.constant 0 : i32
    return %arg0, %c0_i32 : i32, i32
  }
}

</mosaic_0001>

<llo_original>
// kernel: tpu_custom_call.1
$region0: #{tpu_custom_call.1}
  #allocation0 [shape = 'u32[]', space=smem, size = 0x4, offset = 0x4, fixed_abs, tag = 'smem constant byte address 0x4 - core index']
  #allocation1 [shape = 'u32[144,128]{1,0:T(1,128)}', space=vmem, size = 0x12000, scoped, tag = 'internal scratch']
  %s0 = inlined_call_operand.vmem [shape: f32[2,128], index: 0, kind: input, shape index: {}]
  %s1 = inlined_call_operand.vmem [shape: f32[128,4], index: 1, kind: input, shape index: {}]
  %s2 = inlined_call_operand.hbm [shape: f32[2,4], index: 2, kind: output, shape index: {}]
  %s3 = sld [smem:[#allocation0]]
  $region18: #{tpu_custom_call.1} parent=0
    _
  %s5 = ssub.s32 1, %s3
  %s6 = scalar_select 0, %s5, %s3
  $region1: #{tpu_custom_call.1} parent=0
    #allocation2 [shape = 'u8[1024]{0}', space=vmem, size = 0x400, scoped, tag = 'output window, operand 0, single buffered']
    #allocation3 [shape = 's32[1]{0}', space=sflag, size = 0x4, scoped, tag = 'scoped memory for tpu_custom_call.1']
    %7 = vsyncpa [#allocation3], 0
    // Predicated region
    $region2: #{tpu_custom_call.1} parent=1 // pred_check
      _
    $region3: #{tpu_custom_call.1} parent=1 // pred_check_branch
      %9 = sbr.rel (0) target = $region5
    $region4: #{tpu_custom_call.1} parent=1 // pred_region
      _
    $region5: #{tpu_custom_call.1} parent=1 // pred_fallthru
      _
    // Predicated region
    $region6: #{tpu_custom_call.1} parent=1 // pred_check
      _
    $region7: #{tpu_custom_call.1} parent=1 // pred_check_branch
      %11 = sbr.rel (0) target = $region9
    $region8: #{tpu_custom_call.1} parent=1 // pred_region
      _
    $region9: #{tpu_custom_call.1} parent=1 // pred_fallthru
      _
    %v12 = vld [vmem:[%s0] sm:$0x3]
    %v13 = vld [vmem:[%s1] sm:$0xff]
    %v14 = vld [vmem:[%s1 + $0x8] sm:$0xff]
    %v15 = vld [vmem:[%s1 + $0x10] sm:$0xff]
    %v16 = vld [vmem:[%s1 + $0x18] sm:$0xff]
    %v17 = vld [vmem:[%s1 + $0x20] sm:$0xff]
    %v18 = vld [vmem:[%s1 + $0x28] sm:$0xff]
    %v19 = vld [vmem:[%s1 + $0x30] sm:$0xff]
    %v20 = vld [vmem:[%s1 + $0x38] sm:$0xff]
    %v21 = vld [vmem:[%s1 + $0x40] sm:$0xff]
    %v22 = vld [vmem:[%s1 + $0x48] sm:$0xff]
    %v23 = vld [vmem:[%s1 + $0x50] sm:$0xff]
    %v24 = vld [vmem:[%s1 + $0x58] sm:$0xff]
    %v25 = vld [vmem:[%s1 + $0x60] sm:$0xff]
    %v26 = vld [vmem:[%s1 + $0x68] sm:$0xff]
    %v27 = vld [vmem:[%s1 + $0x70] sm:$0xff]
    %v28 = vld [vmem:[%s1 + $0x78] sm:$0xff]
    %29 = vmatprep.subr.mxu0 0.0
    %30 = vmatpush1.msra.mxu0 %v28
    %31 = vmatprep.subr.mxu0 0.0
    %32 = vmatpush1.msra.mxu0 %v27
    %33 = vmatprep.subr.mxu0 0.0
    %34 = vmatpush1.msra.mxu0 %v26
    %35 = vmatprep.subr.mxu0 0.0
    %36 = vmatpush1.msra.mxu0 %v25
    %37 = vmatprep.subr.mxu0 0.0
    %38 = vmatpush1.msra.mxu0 %v24
    %39 = vmatprep.subr.mxu0 0.0
    %40 = vmatpush1.msra.mxu0 %v23
    %41 = vmatprep.subr.mxu0 0.0
    %42 = vmatpush1.msra.mxu0 %v22
    %43 = vmatprep.subr.mxu0 0.0
    %44 = vmatpush1.msra.mxu0 %v21
    %45 = vmatprep.subr.mxu0 0.0
    %46 = vmatpush1.msra.mxu0 %v20
    %47 = vmatprep.subr.mxu0 0.0
    %48 = vmatpush1.msra.mxu0 %v19
    %49 = vmatprep.subr.mxu0 0.0
    %50 = vmatpush1.msra.mxu0 %v18
    %51 = vmatprep.subr.mxu0 0.0
    %52 = vmatpush1.msra.mxu0 %v17
    %53 = vmatprep.subr.mxu0 0.0
    %54 = vmatpush1.msra.mxu0 %v16
    %55 = vmatprep.subr.mxu0 0.0
    %56 = vmatpush1.msra.mxu0 %v15
    %57 = vmatprep.subr.mxu0 0.0
    %58 = vmatpush1.msra.mxu0 %v14
    %59 = vmatprep.subr.mxu0 0.0
    %60 = vmatpush1.msra.mxu0 %v13
    %61 = vmatprep.subr.mxu0 0.0
    %62 = vmatpush2.msra.mxu0 0.0
    %63 = vmatprep.subr.mxu0 0.0
    %64 = vmatpush2.msra.mxu0 0.0
    %65 = vmatprep.subr.mxu0 0.0
    %66 = vmatpush2.msra.mxu0 0.0
    %67 = vmatprep.subr.mxu0 0.0
    %68 = vmatpush2.msra.mxu0 0.0
    %69 = vmatprep.subr.mxu0 0.0
    %70 = vmatpush2.msra.mxu0 0.0
    %71 = vmatprep.subr.mxu0 0.0
    %72 = vmatpush2.msra.mxu0 0.0
    %73 = vmatprep.subr.mxu0 0.0
    %74 = vmatpush2.msra.mxu0 0.0
    %75 = vmatprep.subr.mxu0 0.0
    %76 = vmatpush2.msra.mxu0 0.0
    %77 = vmatprep.subr.mxu0 0.0
    %78 = vmatpush2.msra.mxu0 0.0
    %79 = vmatprep.subr.mxu0 0.0
    %80 = vmatpush2.msra.mxu0 0.0
    %81 = vmatprep.subr.mxu0 0.0
    %82 = vmatpush2.msra.mxu0 0.0
    %83 = vmatprep.subr.mxu0 0.0
    %84 = vmatpush2.msra.mxu0 0.0
    %85 = vmatprep.subr.mxu0 0.0
    %86 = vmatpush2.msra.mxu0 0.0
    %87 = vmatprep.subr.mxu0 0.0
    %88 = vmatpush2.msra.mxu0 0.0
    %89 = vmatprep.subr.mxu0 0.0
    %90 = vmatpush2.msra.mxu0 0.0
    %91 = vmatprep.subr.mxu0 0.0
    %92 = vmatpush2.msra.mxu0 0.0
    %93 = vmatprep.mubr.f32.mxu0 0.0
    %94 = vmatmul.mubr.f32.gmra.mxu0 %v12
    %v95 = vpop.f32.mrf.mxu0
    %v96 = vadd.f32 0.0, %v95
    %v97 = vpop.f32.mrf.mxu0
    %98 = vdwg.mxu0
    %v99 = vxor.u32 %v96, 2147483648
    %v100 = vmul.f32 %v99, 1.442695
    %v101 = vpow.pop %v100
    %v102 = vadd.f32 %v101, 1.0
    %v103 = vrcp.pop %v102
    %v104 = vmul.f32 1.0, %v103
    %vm105 = vcmask 25600
    %106 = vst.msk [vmem:[#allocation2] sm:$0x3] %vm105, %v104
    // Predicated region
    $region10: #{tpu_custom_call.1} parent=1 // pred_check
      _
    $region11: #{tpu_custom_call.1} parent=1 // pred_check_branch
      %108 = sbr.rel (0) target = $region13
    $region12: #{tpu_custom_call.1} parent=1 // pred_region
      %s110 = ssub.s32 32, 32
      %111 = vsyncadd [#allocation3], %s110
      %s113 = sshll.u32 [#allocation2], 4
      %s114 = int_to_ptr.vmem [resolvable:$true] %s113
      %116 = dma.vmem_to_hbm [thread:$0]  %s114, 32, %s2, [#allocation3]
    $region13: #{tpu_custom_call.1} parent=1 // pred_fallthru
      _
    // Predicated region
    $region14: #{tpu_custom_call.1} parent=1 // pred_check
      _
    $region15: #{tpu_custom_call.1} parent=1 // pred_check_branch
      %118 = sbr.rel (0) target = $region17
    $region16: #{tpu_custom_call.1} parent=1 // pred_region
      %119 = dma.done [#allocation3], 32
    $region17: #{tpu_custom_call.1} parent=1 // pred_fallthru
      _
    %120 = vsyncpa [#allocation3], 1

</llo_original>
